<compile_context>
chip_gen: v5e
topology: v5e:2x2
jax: 0.10.0
libtpu: 0.0.40
codegen_flags: <defaults>
</compile_context>

<pallas_src>
import math

import jax
import jax.numpy as jnp
from jax.experimental import pallas as pl
from jax.experimental.pallas import tpu as pltpu


_MAX_DMA_CHUNKS = 8          # max DMA descriptors in flight
_MIN_CHUNK_BYTES = 1 << 20   # only bother splitting above ~1 MiB per chunk


def _dma_copy_callable(shape, dtype, chunks):
    """pallas_call that copies an HBM array to a fresh HBM buffer via chunked DMA."""
    n_chunks = len(chunks)

    def kernel(x_hbm, o_hbm, sems):
        # Issue every chunk before waiting so several DMAs are in flight; each
        # chunk gets its own semaphore.  Chunk bounds are static Python ints.
        copies = []
        for idx, (start, size) in enumerate(chunks):
            cp = pltpu.make_async_copy(
                x_hbm.at[pl.ds(start, size)],
                o_hbm.at[pl.ds(start, size)],
                sems.at[idx],
            )
            cp.start()
            copies.append(cp)
        for cp in copies:
            cp.wait()

    nbytes = math.prod(shape) * jnp.dtype(dtype).itemsize
    return pl.pallas_call(
        kernel,
        out_shape=jax.ShapeDtypeStruct(shape, dtype),
        in_specs=[pl.BlockSpec(memory_space=pl.ANY)],    # raw HBM ref, no auto-DMA
        out_specs=pl.BlockSpec(memory_space=pl.ANY),
        scratch_shapes=[pltpu.SemaphoreType.DMA((n_chunks,))],
        cost_estimate=pl.CostEstimate(
            flops=0, transcendentals=0, bytes_accessed=2 * nbytes),
    )


def _pallas_materialize_copy(x: jnp.ndarray) -> jnp.ndarray:
    """Explicit materializing copy (what torch's .contiguous() would do on a
    NON-contiguous tensor), implemented as a direct HBM->HBM DMA copy."""
    if x.size == 0:
        return x
    if x.ndim == 0:
        return _pallas_materialize_copy(x.reshape(1)).reshape(())

    d0 = int(x.shape[0])
    nbytes = int(x.size) * x.dtype.itemsize
    # Chunk along the leading axis so a few DMAs stream concurrently; small
    # arrays use a single full-array DMA (the copy runs at HBM roofline either
    # way — no VMEM staging, no grid, no pad/slice for misaligned sizes).
    if d0 <= 1 or nbytes <= _MIN_CHUNK_BYTES:
        n_chunks = 1
    else:
        n_chunks = int(min(_MAX_DMA_CHUNKS, d0, max(1, nbytes // _MIN_CHUNK_BYTES)))
    bounds = [(i * d0) // n_chunks for i in range(n_chunks + 1)]
    chunks = tuple(
        (bounds[i], bounds[i + 1] - bounds[i])
        for i in range(n_chunks)
        if bounds[i + 1] > bounds[i]
    )
    return _dma_copy_callable(x.shape, x.dtype, chunks)(x)


# ------------------------------ View module -------------------------------- #

class View:
    """JAX/Pallas equivalent of the PyTorch View wrapper module.

    Exact torch semantics: `.contiguous()` on an already-contiguous tensor is a
    no-op, and JAX arrays are always contiguous, so the forward pass is a
    metadata-only `jnp.reshape` for both contiguous=False and contiguous=True.

    `force_copy=True` (extra, not in the torch module) additionally forces an
    explicit materializing copy through the Pallas HBM->HBM DMA kernel before
    reshaping — useful when a fresh buffer is genuinely required.
    """

    def __init__(self, shape, contiguous: bool = False, force_copy: bool = False):
        self.shape = tuple(shape)
        self.contiguous = contiguous
        self.force_copy = force_copy

    def _resolve_shape(self, numel: int):
        shape = list(self.shape)
        if shape.count(-1) > 1:
            raise ValueError("only one -1 wildcard is allowed in View shape")
        if -1 in shape:
            idx = shape.index(-1)
            known = math.prod(s for j, s in enumerate(shape) if j != idx)
            if known == 0 or numel % known != 0:
                raise ValueError(
                    f"cannot infer -1 in {self.shape}: {numel} not divisible by {known}")
            shape[idx] = numel // known
        if math.prod(shape) != numel:
            raise ValueError(f"View shape {self.shape} incompatible with {numel} elements")
        return tuple(shape)

    def __call__(self, inputs: jnp.ndarray) -> jnp.ndarray:
        target = self._resolve_shape(inputs.size)
        if self.contiguous and self.force_copy:
            # Explicit materializing copy (HBM->HBM DMA), then metadata reshape.
            inputs = _pallas_materialize_copy(inputs)
        # torch .view on a contiguous tensor is metadata-only: no copy.
        return jnp.reshape(inputs, target)


# --------------------------------- main ------------------------------------ #

if __name__ == "__main__":
    key = jax.random.PRNGKey(0)

    # Primary example: NCHW (2, 4, 16, 16) -> (2, 4, 256).
    x = jax.random.normal(key, (2, 4, 16, 16), dtype=jnp.float32)

    # Faithful torch path: contiguous=True on an already-contiguous array is a
    # no-op -> pure reshape, zero HBM traffic.
    y = jax.block_until_ready(View(shape=(2, 4, -1), contiguous=True)(x))
    assert y.shape == (2, 4, 256) and y.dtype == x.dtype
    assert bool(jnp.array_equal(y, x.reshape(2, 4, 256)))

    # Forced materializing copy exercises the Pallas HBM->HBM DMA kernel.
    yk = jax.block_until_ready(
        View(shape=(2, 4, -1), contiguous=True, force_copy=True)(x))
    assert yk.shape == (2, 4, 256)
    assert bool(jnp.array_equal(yk, x.reshape(2, 4, 256)))

    # Metadata-only path (contiguous=False).
    y2 = jax.block_until_ready(View(shape=(8, -1))(x))
    assert y2.shape == (8, 256)
    assert bool(jnp.array_equal(y2, x.reshape(8, 256)))

    # bf16 forced copy (byte-exact DMA, dtype-agnostic).
    xb = x.astype(jnp.bfloat16)
    yb = jax.block_until_ready(
        View(shape=(2, -1), contiguous=True, force_copy=True)(xb))
    assert yb.dtype == jnp.bfloat16 and yb.shape == (2, 1024)
    assert bool(jnp.array_equal(yb, xb.reshape(2, 1024)))

    # Non-128-aligned numel: no pad, no slice, single DMA handles it directly.
    xo = jax.random.normal(key, (2, 3, 50, 30), dtype=jnp.float32)   # 9000 elems
    yo = jax.block_until_ready(
        View(shape=(2, -1), contiguous=True, force_copy=True)(xo))
    assert yo.shape == (2, 4500)
    assert bool(jnp.array_equal(yo, xo.reshape(2, 4500)))

    # Larger input exercises the multi-chunk (several DMAs in flight) path.
    xl = jax.random.normal(key, (8, 4, 320, 128), dtype=jnp.float32)  # ~5 MiB
    yl = jax.block_until_ready(
        View(shape=(8, 4, -1), contiguous=True, force_copy=True)(xl))
    assert yl.shape == (8, 4, 320 * 128)
    assert bool(jnp.array_equal(yl, xl.reshape(8, 4, -1)))

    print("KERNEL_OK")
</pallas_src>

<mosaic_0001>
module attributes {stable_mosaic.version = 11 : i64} {
  func.func @kernel(%arg0: memref<2x4x16x16xf32, #tpu.memory_space<any>>, %arg1: memref<2x4x16x16xf32, #tpu.memory_space<any>>, %arg2: memref<1x!tpu.dma_semaphore, #tpu.memory_space<semaphore_mem>>) attributes {dimension_semantics = [], scalar_prefetch = 0 : i64, scratch_operands = 1 : i64, tpu.core_type = #tpu.core_type<tc>} {
    %c0_i32 = arith.constant 0 : i32
    %c0_i32_0 = arith.constant 0 : i32
    %c0_i32_1 = arith.constant 0 : i32
    %c0_i32_2 = arith.constant 0 : i32
    %c0_i32_3 = arith.constant 0 : i32
    %0 = tpu.memref_slice %arg0[%c0_i32_0, %c0_i32_1, %c0_i32_2, %c0_i32_3] : memref<2x4x16x16xf32, #tpu.memory_space<any>> -> memref<2x4x16x16xf32, #tpu.memory_space<any>>
    %c0_i32_4 = arith.constant 0 : i32
    %c0_i32_5 = arith.constant 0 : i32
    %c0_i32_6 = arith.constant 0 : i32
    %c0_i32_7 = arith.constant 0 : i32
    %1 = tpu.memref_slice %arg1[%c0_i32_4, %c0_i32_5, %c0_i32_6, %c0_i32_7] : memref<2x4x16x16xf32, #tpu.memory_space<any>> -> memref<2x4x16x16xf32, #tpu.memory_space<any>>
    %2 = tpu.memref_slice %arg2[%c0_i32] : memref<1x!tpu.dma_semaphore, #tpu.memory_space<semaphore_mem>> -> memref<1x!tpu.dma_semaphore, #tpu.memory_space<semaphore_mem>>
    %3 = tpu.memref_squeeze %2 : memref<1x!tpu.dma_semaphore, #tpu.memory_space<semaphore_mem>> -> memref<!tpu.dma_semaphore, #tpu.memory_space<semaphore_mem>>
    tpu.enqueue_dma source(%0 : memref<2x4x16x16xf32, #tpu.memory_space<any>>) target(%1 : memref<2x4x16x16xf32, #tpu.memory_space<any>>) target_semaphore(%3 : memref<!tpu.dma_semaphore, #tpu.memory_space<semaphore_mem>>)
    %c0_i32_8 = arith.constant 0 : i32
    %c0_i32_9 = arith.constant 0 : i32
    %c0_i32_10 = arith.constant 0 : i32
    %c0_i32_11 = arith.constant 0 : i32
    %c0_i32_12 = arith.constant 0 : i32
    %4 = tpu.memref_slice %arg0[%c0_i32_9, %c0_i32_10, %c0_i32_11, %c0_i32_12] : memref<2x4x16x16xf32, #tpu.memory_space<any>> -> memref<2x4x16x16xf32, #tpu.memory_space<any>>
    %c0_i32_13 = arith.constant 0 : i32
    %c0_i32_14 = arith.constant 0 : i32
    %c0_i32_15 = arith.constant 0 : i32
    %c0_i32_16 = arith.constant 0 : i32
    %5 = tpu.memref_slice %arg1[%c0_i32_13, %c0_i32_14, %c0_i32_15, %c0_i32_16] : memref<2x4x16x16xf32, #tpu.memory_space<any>> -> memref<2x4x16x16xf32, #tpu.memory_space<any>>
    %6 = tpu.memref_slice %arg2[%c0_i32_8] : memref<1x!tpu.dma_semaphore, #tpu.memory_space<semaphore_mem>> -> memref<1x!tpu.dma_semaphore, #tpu.memory_space<semaphore_mem>>
    %7 = tpu.memref_squeeze %6 : memref<1x!tpu.dma_semaphore, #tpu.memory_space<semaphore_mem>> -> memref<!tpu.dma_semaphore, #tpu.memory_space<semaphore_mem>>
    tpu.wait_dma2 semaphore(%7 : memref<!tpu.dma_semaphore, #tpu.memory_space<semaphore_mem>>) src(%4 : memref<2x4x16x16xf32, #tpu.memory_space<any>>) dst(%5 : memref<2x4x16x16xf32, #tpu.memory_space<any>>)
    return
  }
}

</mosaic_0001>

<llo_original>
// kernel: tpu_custom_call.1
$region0: #{tpu_custom_call.1}
  #allocation0 [shape = 'u32[]', space=smem, size = 0x4, offset = 0x4, fixed_abs, tag = 'smem constant byte address 0x4 - core index']
  #allocation1 [shape = 'u32[72,128]{1,0:T(1,128)}', space=vmem, size = 0x9000, scoped, tag = 'internal scratch']
  #allocation2 [shape = 's32[1]{0}', space=sflag, size = 0x4, scoped, tag = 'scratch operand']
  #allocation3 [shape = 's32[]', space=sflag, size = 0x4, offset = 0, fixed_abs, tag = 'sflag constant byte address 0x0 - dummy sync flag']
  #allocation4 [shape = 'u32[0]{0}', space=smem, size = 0, offset = 0, fixed_abs, tag = 'smem constant byte address 0x0 - null']
  %s0 = inlined_call_operand.hbm [shape: f32[2,4,16,16], index: 0, kind: input, shape index: {}]
  %s1 = inlined_call_operand.hbm [shape: f32[2,4,16,16], index: 1, kind: output, shape index: {}]
  %s2 = sld [smem:[#allocation0]]
  $region2: #{tpu_custom_call.1} parent=0
    _
  %s4 = ssub.s32 1, %s2
  %s5 = scalar_select 0, %s4, %s2
  %s7 = sshll.u32 1, 14
  %s8 = sxor.u32 4294967295, %s7
  %s10 = sshll.u32 %s0, 4
  %s11 = int_to_ptr.hbm [resolvable:$true] %s10
  %s12 = sshll.u32 %s1, 4
  %s13 = int_to_ptr.hbm [resolvable:$true] %s12
  %16 = dma.general %s11, 2048, %s13, [#allocation2], [#allocation3], [#allocation4], 0, 0
  %s17 = smul.u32 2, 4
  %s18 = smul.u32 %s17, 16
  %s19 = smul.u32 %s18, 1
  %s20 = sshll.u32 %s19, 4
  %21 = dma.done [#allocation2], %s20
  %22 = vsyncmov [#allocation2]
  %s23 = vpop.sfrf %22
  %p24 = scmp.eq.s32.totalorder %s23, 0
  %p25 = pneg %p24
  %27 = shalt.err (%p25)

</llo_original>
